<compile_context>
chip_gen: v5e
topology: v5e:2x2
jax: 0.10.0
libtpu: 0.0.40
codegen_flags: <defaults>
</compile_context>

<pallas_src>
import math

import jax
import jax.numpy as jnp
from jax import lax
from jax.experimental import pallas as pl
from jax.experimental.pallas import tpu as pltpu


def fnet_kernel(x_ref, w1_ref, b1_ref, w2_ref, b2_ref, w3_ref, b3_ref, o_ref):
    # x: (tm, in_dim) bf16 | w1: (in_dim, H1) bf16 | w2: (H1, H2) bf16
    # b1: (1, H1) f32 | b2: (1, H2) f32 | w3: (1, H2) f32 | b3: (1, 1) f32 in SMEM
    x = x_ref[...]

    # Layer 1: MXU dot (bf16 operands, f32 accumulation) + bias + ReLU (VPU, f32).
    h1 = jnp.dot(x, w1_ref[...], preferred_element_type=jnp.float32) + b1_ref[...]
    h1 = jnp.maximum(h1, 0.0)

    # Layer 2: MXU dot (bf16 operands, f32 accumulation) + bias + ReLU.
    h2 = jnp.dot(h1.astype(jnp.bfloat16), w2_ref[...],
                 preferred_element_type=jnp.float32) + b2_ref[...]
    h2 = jnp.maximum(h2, 0.0)

    # Layer 3 (H2 -> 1), emitted lane-dense: contract h2's last dim against w3's last
    # dim with w3 as the LHS -> (1, tm) row (dense vst, no masked single-lane stores).
    out_row = lax.dot_general(w3_ref[...], h2, (((1,), (1,)), ((), ())),
                              preferred_element_type=jnp.float32)
    o_ref[...] = (out_row + b3_ref[0, 0]).astype(o_ref.dtype)


def _round_up(x, m):
    return ((x + m - 1) // m) * m


def _choose_tile(batch, block_batch):
    """Batch tile: multiple of 8; multiple of 128 (lane-dense output) whenever more than
    one tile is needed; capped at ~half the batch so v7x's two TensorCores both get
    tiles via dimension_semantics=("parallel",)."""
    block_batch = max(128, (block_batch // 128) * 128)
    if batch <= 128:
        return _round_up(batch, 8)             # single tile; out last dim == full dim
    half = _round_up((batch + 1) // 2, 128)    # >= 2 tiles, multiple of 128 lanes
    return min(block_batch, half)


def fnetwork_forward(state, action, params, *, block_batch=4096):
    """state: (B, state_dim), action: (B, action_dim) -> (B, 1)"""
    w1, b1, w2, b2, w3, b3 = params
    B = state.shape[0]
    in_dim = state.shape[1] + action.shape[1]
    assert w1.shape[0] == in_dim

    # Pre-pack [state | action] once; downcast MXU operands to bf16 (acc stays f32).
    x = jnp.concatenate([state, action], axis=-1).astype(jnp.bfloat16)
    w1b = w1.astype(jnp.bfloat16)
    w2b = w2.astype(jnp.bfloat16)

    tm = _choose_tile(B, block_batch)
    num_tiles = -(-B // tm)        # cdiv; no pad-to-tile copy (tail block is partial)
    bp = num_tiles * tm

    # Constant index_map -> the block is DMA'd once and reused across all grid steps.
    def const(arr):
        return pl.BlockSpec(arr.shape, lambda i, _nd=arr.ndim: (0,) * _nd)

    out = pl.pallas_call(
        fnet_kernel,
        out_shape=jax.ShapeDtypeStruct((1, bp), jnp.float32),
        grid=(num_tiles,),
        in_specs=[
            pl.BlockSpec((tm, in_dim), lambda i: (i, 0)),
            const(w1b), const(b1), const(w2b), const(b2), const(w3),
            pl.BlockSpec(memory_space=pltpu.MemorySpace.SMEM),   # b3: (1, 1) scalar
        ],
        out_specs=pl.BlockSpec((1, tm), lambda i: (0, i)),
        compiler_params=pltpu.CompilerParams(
            dimension_semantics=("parallel",),
            vmem_limit_bytes=40 << 20,   # > v5e's 16 MiB default, < v7x's 64 MiB physical
        ),
    )(x, w1b, b1, w2b, b2, w3, b3)

    return out[0, :B].reshape(B, 1)


def init_params(key, state_dim, action_dim, hidden_sizes=(256, 256)):
    """Matches PyTorch nn.Linear default init U(-1/sqrt(fan_in), 1/sqrt(fan_in)).
    Weight layout is (in_features, out_features) (transposed vs. nn.Linear);
    w3 is kept as a (1, H2) row for the lane-dense output head."""
    in_dim = state_dim + action_dim
    dims = [in_dim, hidden_sizes[0], hidden_sizes[1], 1]
    ws, bs = [], []
    for i in range(3):
        fan_in, fan_out = dims[i], dims[i + 1]
        key, kw, kb = jax.random.split(key, 3)
        bound = 1.0 / math.sqrt(fan_in)
        ws.append(jax.random.uniform(kw, (fan_in, fan_out), jnp.float32, -bound, bound))
        bs.append(jax.random.uniform(kb, (1, fan_out), jnp.float32, -bound, bound))
    w1, w2, w3 = ws
    b1, b2, b3 = bs
    return (w1, b1, w2, b2, w3.T, b3)   # w3.T: (1, H2); b3: (1, 1)


if __name__ == "__main__":
    state_dim, action_dim = 12, 4
    hidden_sizes = (32, 32)

    key = jax.random.PRNGKey(0)
    key, kp = jax.random.split(key)
    params = init_params(kp, state_dim, action_dim, hidden_sizes)

    def reference(state, action, params):
        w1, b1, w2, b2, w3, b3 = params
        xx = jnp.concatenate([state, action], axis=-1)
        h = jnp.maximum(xx @ w1 + b1, 0.0)
        h = jnp.maximum(h @ w2 + b2, 0.0)
        return h @ w3.T + b3

    # (B, block_batch): exercises the single-tile path and the multi-tile + partial-tail path.
    for B, bb in ((16, 4096), (300, 128)):
        kb = jax.random.fold_in(key, B)
        ks, ka = jax.random.split(kb)
        state = jax.random.normal(ks, (B, state_dim), jnp.float32)
        action = jax.random.normal(ka, (B, action_dim), jnp.float32)

        out = fnetwork_forward(state, action, params, block_batch=bb)
        jax.block_until_ready(out)

        ref = reference(state, action, params)
        assert out.shape == (B, 1), out.shape
        err = float(jnp.max(jnp.abs(out - ref)))
        # bf16 MXU operands -> relaxed tolerance vs the pure-f32 reference.
        assert err < 2e-2, f"mismatch vs reference: max|diff|={err}"

    print("KERNEL_OK")
</pallas_src>

<mosaic_0001>
module attributes {stable_mosaic.version = 11 : i64} {
  func.func @fnet_kernel(%arg0: i32, %arg1: memref<16x16xbf16, #tpu.memory_space<vmem>>, %arg2: memref<16x32xbf16, #tpu.memory_space<vmem>>, %arg3: memref<1x32xf32, #tpu.memory_space<vmem>>, %arg4: memref<32x32xbf16, #tpu.memory_space<vmem>>, %arg5: memref<1x32xf32, #tpu.memory_space<vmem>>, %arg6: memref<1x32xf32, #tpu.memory_space<vmem>>, %arg7: memref<1x1xf32, #tpu.memory_space<smem>>, %arg8: memref<1x16xf32, #tpu.memory_space<vmem>>) attributes {dimension_semantics = [#tpu.dimension_semantics<parallel>], iteration_bounds = array<i64: 1>, scalar_prefetch = 0 : i64, scratch_operands = 0 : i64, tpu.core_type = #tpu.core_type<tc>, window_params = [{transform_indices = @transform_0, window_bounds = array<i64: 16, 16>}, {pipeline_mode = #tpu.pipeline_mode<synchronous>, transform_indices = @transform_1, window_bounds = array<i64: 16, 32>}, {pipeline_mode = #tpu.pipeline_mode<synchronous>, transform_indices = @transform_2, window_bounds = array<i64: 1, 32>}, {pipeline_mode = #tpu.pipeline_mode<synchronous>, transform_indices = @transform_3, window_bounds = array<i64: 32, 32>}, {pipeline_mode = #tpu.pipeline_mode<synchronous>, transform_indices = @transform_4, window_bounds = array<i64: 1, 32>}, {pipeline_mode = #tpu.pipeline_mode<synchronous>, transform_indices = @transform_5, window_bounds = array<i64: 1, 32>}, {transform_indices = @transform_6, window_bounds = array<i64: 1, 1>}, {transform_indices = @transform_7, window_bounds = array<i64: 1, 16>}]} {
    %c0 = arith.constant 0 : index
    %c0_0 = arith.constant 0 : index
    %0 = vector.load %arg1[%c0, %c0_0] : memref<16x16xbf16, #tpu.memory_space<vmem>>, vector<16x16xbf16>
    %c0_1 = arith.constant 0 : index
    %c0_2 = arith.constant 0 : index
    %1 = vector.load %arg2[%c0_1, %c0_2] : memref<16x32xbf16, #tpu.memory_space<vmem>>, vector<16x32xbf16>
    %cst = arith.constant dense<0.000000e+00> : vector<16x32xf32>
    %2 = tpu.matmul %0, %1, %cst {dimension_numbers = #tpu.dot_dimension_numbers<[1], [0], [0], [1], [0, 0, 1, 1], [], []>} : vector<16x16xbf16>, vector<16x32xbf16>, vector<16x32xf32> -> vector<16x32xf32>
    %c0_3 = arith.constant 0 : index
    %c0_4 = arith.constant 0 : index
    %3 = vector.load %arg3[%c0_3, %c0_4] : memref<1x32xf32, #tpu.memory_space<vmem>>, vector<1x32xf32>
    %4 = vector.broadcast %3 : vector<1x32xf32> to vector<16x32xf32>
    %5 = arith.addf %2, %4 : vector<16x32xf32>
    %cst_5 = arith.constant 0.000000e+00 : f32
    %6 = vector.broadcast %cst_5 : f32 to vector<16x32xf32>
    %7 = arith.maximumf %5, %6 : vector<16x32xf32>
    %8 = arith.truncf %7 : vector<16x32xf32> to vector<16x32xbf16>
    %c0_6 = arith.constant 0 : index
    %c0_7 = arith.constant 0 : index
    %9 = vector.load %arg4[%c0_6, %c0_7] : memref<32x32xbf16, #tpu.memory_space<vmem>>, vector<32x32xbf16>
    %cst_8 = arith.constant dense<0.000000e+00> : vector<16x32xf32>
    %10 = tpu.matmul %8, %9, %cst_8 {dimension_numbers = #tpu.dot_dimension_numbers<[1], [0], [0], [1], [0, 0, 1, 1], [], []>} : vector<16x32xbf16>, vector<32x32xbf16>, vector<16x32xf32> -> vector<16x32xf32>
    %c0_9 = arith.constant 0 : index
    %c0_10 = arith.constant 0 : index
    %11 = vector.load %arg5[%c0_9, %c0_10] : memref<1x32xf32, #tpu.memory_space<vmem>>, vector<1x32xf32>
    %12 = vector.broadcast %11 : vector<1x32xf32> to vector<16x32xf32>
    %13 = arith.addf %10, %12 : vector<16x32xf32>
    %cst_11 = arith.constant 0.000000e+00 : f32
    %14 = vector.broadcast %cst_11 : f32 to vector<16x32xf32>
    %15 = arith.maximumf %13, %14 : vector<16x32xf32>
    %c0_12 = arith.constant 0 : index
    %c0_13 = arith.constant 0 : index
    %16 = vector.load %arg6[%c0_12, %c0_13] : memref<1x32xf32, #tpu.memory_space<vmem>>, vector<1x32xf32>
    %cst_14 = arith.constant dense<0.000000e+00> : vector<1x16xf32>
    %17 = tpu.matmul %16, %15, %cst_14 {dimension_numbers = #tpu.dot_dimension_numbers<[1], [1], [0], [0], [0, 0, 1, 0], [], []>} : vector<1x32xf32>, vector<16x32xf32>, vector<1x16xf32> -> vector<1x16xf32>
    %c0_15 = arith.constant 0 : index
    %c0_16 = arith.constant 0 : index
    %18 = memref.load %arg7[%c0_15, %c0_16] : memref<1x1xf32, #tpu.memory_space<smem>>
    %19 = vector.broadcast %18 : f32 to vector<1x16xf32>
    %20 = arith.addf %17, %19 : vector<1x16xf32>
    %c0_17 = arith.constant 0 : index
    %c0_18 = arith.constant 0 : index
    %21 = vector.load %arg8[%c0_17, %c0_18] : memref<1x16xf32, #tpu.memory_space<vmem>>, vector<1x16xf32>
    tpu.vector_store %arg8[%c0_17, %c0_18], %20 {strides = array<i32>} : memref<1x16xf32, #tpu.memory_space<vmem>>, vector<1x16xf32>,
    return
  }
  func.func @transform_0(%arg0: i32) -> (i32, i32) {
    %c0_i32 = arith.constant 0 : i32
    %c0_i32_0 = arith.constant 0 : i32
    return %arg0, %c0_i32 : i32, i32
  }
  func.func @transform_1(%arg0: i32) -> (i32, i32) {
    %c0_i32 = arith.constant 0 : i32
    %c0_i32_0 = arith.constant 0 : i32
    %c0_i32_1 = arith.constant 0 : i32
    return %c0_i32, %c0_i32_0 : i32, i32
  }
  func.func @transform_2(%arg0: i32) -> (i32, i32) {
    %c0_i32 = arith.constant 0 : i32
    %c0_i32_0 = arith.constant 0 : i32
    %c0_i32_1 = arith.constant 0 : i32
    return %c0_i32, %c0_i32_0 : i32, i32
  }
  func.func @transform_3(%arg0: i32) -> (i32, i32) {
    %c0_i32 = arith.constant 0 : i32
    %c0_i32_0 = arith.constant 0 : i32
    %c0_i32_1 = arith.constant 0 : i32
    return %c0_i32, %c0_i32_0 : i32, i32
  }
  func.func @transform_4(%arg0: i32) -> (i32, i32) {
    %c0_i32 = arith.constant 0 : i32
    %c0_i32_0 = arith.constant 0 : i32
    %c0_i32_1 = arith.constant 0 : i32
    return %c0_i32, %c0_i32_0 : i32, i32
  }
  func.func @transform_5(%arg0: i32) -> (i32, i32) {
    %c0_i32 = arith.constant 0 : i32
    %c0_i32_0 = arith.constant 0 : i32
    %c0_i32_1 = arith.constant 0 : i32
    return %c0_i32, %c0_i32_0 : i32, i32
  }
  func.func @transform_6(%arg0: i32) -> (i32, i32) {
    %c0_i32 = arith.constant 0 : i32
    %c0_i32_0 = arith.constant 0 : i32
    %c0_i32_1 = arith.constant 0 : i32
    return %c0_i32, %c0_i32_0 : i32, i32
  }
  func.func @transform_7(%arg0: i32) -> (i32, i32) {
    %c0_i32 = arith.constant 0 : i32
    %c0_i32_0 = arith.constant 0 : i32
    return %c0_i32, %arg0 : i32, i32
  }
}

</mosaic_0001>

<llo_original>
// kernel: tpu_custom_call.1
$region0: #{tpu_custom_call.1}
  #allocation0 [shape = 'u32[]', space=smem, size = 0x4, offset = 0x4, fixed_abs, tag = 'smem constant byte address 0x4 - core index']
  #allocation1 [shape = 'u32[72,128]{1,0:T(1,128)}', space=vmem, size = 0x9000, scoped, tag = 'internal scratch']
  #allocation2 [shape = 'f32[1,1]{1,0:T(1,128)S(6)}', space=smem, size = 0x200, scoped, tag = 'scoped memory for tpu_custom_call.1']
  %s0 = inlined_call_operand.hbm [shape: bf16[16,16], index: 0, kind: input, shape index: {}]
  %s1 = inlined_call_operand.hbm [shape: bf16[16,32], index: 1, kind: input, shape index: {}]
  %s2 = inlined_call_operand.vmem [shape: f32[1,32], index: 2, kind: input, shape index: {}]
  %s3 = inlined_call_operand.hbm [shape: bf16[32,32], index: 3, kind: input, shape index: {}]
  %s4 = inlined_call_operand.vmem [shape: f32[1,32], index: 4, kind: input, shape index: {}]
  %s5 = inlined_call_operand.vmem [shape: f32[1,32], index: 5, kind: input, shape index: {}]
  %s6 = inlined_call_operand.<no memory space> [shape: f32[1,1], index: 6, kind: input, shape index: {}]
  %s7 = inlined_call_operand.hbm [shape: f32[1,16], index: 7, kind: output, shape index: {}]
  %s8 = sld [smem:[#allocation0]]
  $region50: #{tpu_custom_call.1} parent=0
    _
  %s10 = ssub.s32 1, %s8
  %s11 = scalar_select 0, %s10, %s8
  %12 = sst [smem:[#allocation2]] %s6
  $region1: #{tpu_custom_call.1} parent=0
    #allocation3 [shape = 'u8[4096]{0}', space=vmem, size = 0x1000, scoped, tag = 'input window, operand 0, single buffered']
    #allocation4 [shape = 's32[1]{0}', space=sflag, size = 0x4, scoped, tag = 'scoped memory for tpu_custom_call.1']
    #allocation5 [shape = 's32[1]{0}', space=sflag, size = 0x4, scoped, tag = 'scoped memory for tpu_custom_call.1']
    #allocation6 [shape = 'u8[4096]{0}', space=vmem, size = 0x1000, scoped, tag = 'input window, operand 1, single buffered']
    #allocation7 [shape = 's32[1]{0}', space=sflag, size = 0x4, scoped, tag = 'scoped memory for tpu_custom_call.1']
    #allocation8 [shape = 'u8[8192]{0}', space=vmem, size = 0x2000, scoped, tag = 'input window, operand 3, single buffered']
    #allocation9 [shape = 'u8[512]{0}', space=vmem, size = 0x400, scoped, tag = 'output window, operand 0, single buffered']
    %13 = vsyncpa [#allocation4], 0
    %14 = vsyncpa [#allocation7], 0
    %15 = vsyncpa [#allocation5], 0
    // Predicated region
    $region2: #{tpu_custom_call.1} parent=1 // pred_check
      _
    $region3: #{tpu_custom_call.1} parent=1 // pred_check_branch
      %17 = sbr.rel (0) target = $region5
    $region4: #{tpu_custom_call.1} parent=1 // pred_region
      %19 = vsyncadd [#allocation4], 0
      %s20 = sshll.u32 %s0, 4
      %s21 = int_to_ptr.hbm [resolvable:$true] %s20
      %s22 = sshll.u32 [#allocation3], 4
      %s23 = int_to_ptr.vmem [resolvable:$true] %s22
      %28 = dma.hbm_to_vmem [thread:$0]  %s21, 128, %s23, [#allocation4], 64, 64, 4
    $region5: #{tpu_custom_call.1} parent=1 // pred_fallthru
      _
    // Predicated region
    $region6: #{tpu_custom_call.1} parent=1 // pred_check
      _
    $region7: #{tpu_custom_call.1} parent=1 // pred_check_branch
      %30 = sbr.rel (0) target = $region9
    $region8: #{tpu_custom_call.1} parent=1 // pred_region
      %32 = vsyncadd [#allocation7], 0
      %s33 = sshll.u32 %s1, 4
      %s34 = int_to_ptr.hbm [resolvable:$true] %s33
      %s35 = sshll.u32 [#allocation6], 4
      %s36 = int_to_ptr.vmem [resolvable:$true] %s35
      %41 = dma.hbm_to_vmem [thread:$0]  %s34, 128, %s36, [#allocation7], 64, 64, 4
    $region9: #{tpu_custom_call.1} parent=1 // pred_fallthru
      _
    // Predicated region
    $region10: #{tpu_custom_call.1} parent=1 // pred_check
      _
    $region11: #{tpu_custom_call.1} parent=1 // pred_check_branch
      %43 = sbr.rel (0) target = $region13
    $region12: #{tpu_custom_call.1} parent=1 // pred_region
      _
    $region13: #{tpu_custom_call.1} parent=1 // pred_fallthru
      _
    // Predicated region
    $region14: #{tpu_custom_call.1} parent=1 // pred_check
      _
    $region15: #{tpu_custom_call.1} parent=1 // pred_check_branch
      %45 = sbr.rel (0) target = $region17
    $region16: #{tpu_custom_call.1} parent=1 // pred_region
      %47 = vsyncadd [#allocation7], 0
      %s48 = sshll.u32 %s3, 4
      %s49 = int_to_ptr.hbm [resolvable:$true] %s48
      %s50 = sshll.u32 [#allocation8], 4
      %s51 = int_to_ptr.vmem [resolvable:$true] %s50
      %56 = dma.hbm_to_vmem [thread:$0]  %s49, 256, %s51, [#allocation7], 64, 64, 4
    $region17: #{tpu_custom_call.1} parent=1 // pred_fallthru
      _
    // Predicated region
    $region18: #{tpu_custom_call.1} parent=1 // pred_check
      _
    $region19: #{tpu_custom_call.1} parent=1 // pred_check_branch
      %58 = sbr.rel (0) target = $region21
    $region20: #{tpu_custom_call.1} parent=1 // pred_region
      _
    $region21: #{tpu_custom_call.1} parent=1 // pred_fallthru
      _
    // Predicated region
    $region22: #{tpu_custom_call.1} parent=1 // pred_check
      _
    $region23: #{tpu_custom_call.1} parent=1 // pred_check_branch
      %60 = sbr.rel (0) target = $region25
    $region24: #{tpu_custom_call.1} parent=1 // pred_region
      _
    $region25: #{tpu_custom_call.1} parent=1 // pred_fallthru
      _
    // Predicated region
    $region26: #{tpu_custom_call.1} parent=1 // pred_check
      _
    $region27: #{tpu_custom_call.1} parent=1 // pred_check_branch
      %62 = sbr.rel (0) target = $region29
    $region28: #{tpu_custom_call.1} parent=1 // pred_region
      _
    $region29: #{tpu_custom_call.1} parent=1 // pred_fallthru
      _
    // Predicated region
    $region30: #{tpu_custom_call.1} parent=1 // pred_check
      _
    $region31: #{tpu_custom_call.1} parent=1 // pred_check_branch
      %64 = sbr.rel (0) target = $region33
    $region32: #{tpu_custom_call.1} parent=1 // pred_region
      %66 = dma.done [#allocation4], 128
    $region33: #{tpu_custom_call.1} parent=1 // pred_fallthru
      _
    // Predicated region
    $region34: #{tpu_custom_call.1} parent=1 // pred_check
      _
    $region35: #{tpu_custom_call.1} parent=1 // pred_check_branch
      %68 = sbr.rel (0) target = $region37
    $region36: #{tpu_custom_call.1} parent=1 // pred_region
      %70 = dma.done [#allocation7], 128
    $region37: #{tpu_custom_call.1} parent=1 // pred_fallthru
      _
    // Predicated region
    $region38: #{tpu_custom_call.1} parent=1 // pred_check
      _
    $region39: #{tpu_custom_call.1} parent=1 // pred_check_branch
      %72 = sbr.rel (0) target = $region41
    $region40: #{tpu_custom_call.1} parent=1 // pred_region
      %74 = dma.done [#allocation7], 256
    $region41: #{tpu_custom_call.1} parent=1 // pred_fallthru
      _
    %v76 = vld [vmem:[#allocation3] sm:$0xf]
    %v77 = vld [vmem:[#allocation3 + $0x4] sm:$0xf]
    %v78 = vld [vmem:[#allocation6] sm:$0xf]
    %v79 = vld [vmem:[#allocation6 + $0x4] sm:$0xf]
    %v80 = vld [vmem:[%s2] sm:$0x1]
    %v82 = vperm.slane %v80, 0
    %v86 = vunpack.c.l.b16 %v76
    %v87 = vunpack.c.l.b16 %v77
    %v88 = vpack.c.b16 %v87, %v86
    %v91 = vunpack.c.l.b16 %v78
    %v92 = vunpack.c.l.b16 %v79
    %v93 = vpack.c.b16 %v92, %v91
    %vm95 = vcmask 130048
    %v97 = vsel %vm95, %v88, 0
    %99 = vmatpush.bf16.msra.mxu0 0
    %100 = vmatpush.bf16.msra.mxu0 0
    %101 = vmatpush.bf16.msra.mxu0 0
    %102 = vmatpush.bf16.msra.mxu0 0
    %103 = vmatpush.bf16.msra.mxu0 0
    %104 = vmatpush.bf16.msra.mxu0 0
    %105 = vmatpush.bf16.msra.mxu0 0
    %106 = vmatpush.bf16.msra.mxu0 %v93
    %107 = vmatmul.bf16.gmra.mxu0 %v97
    %v108 = vpop.f32.mrf.mxu0
    %v109 = vadd.f32 %v82, %v108
    %v110 = vpop.f32.mrf.mxu0
    %v111 = vadd.f32 %v82, %v110
    %112 = vdwg.mxu0
    %v113 = vmax.f32 %v109, 0.0
    %v114 = vmax.f32 %v111, 0.0
    %v115 = vpack.c.bf16 %v114, %v113
    %v116 = vld [vmem:[#allocation8] sm:$0xf]
    %v117 = vld [vmem:[#allocation8 + $0x4] sm:$0xf]
    %v118 = vld [vmem:[#allocation8 + $0x8] sm:$0xf]
    %v119 = vld [vmem:[#allocation8 + $0xc] sm:$0xf]
    %v120 = vld [vmem:[%s4] sm:$0x1]
    %v122 = vperm.slane %v120, 0
    %v128 = vunpack.c.l.b16 %v116
    %v129 = vunpack.c.l.b16 %v117
    %v130 = vunpack.c.l.b16 %v118
    %v131 = vunpack.c.l.b16 %v119
    %v132 = vpack.c.b16 %v129, %v128
    %v133 = vpack.c.b16 %v131, %v130
    %vm136 = vcmask 261120
    %v138 = vsel %vm136, %v115, 0
    %140 = vmatpush.bf16.msra.mxu0 0
    %141 = vmatpush.bf16.msra.mxu0 0
    %142 = vmatpush.bf16.msra.mxu0 0
    %143 = vmatpush.bf16.msra.mxu0 0
    %144 = vmatpush.bf16.msra.mxu0 0
    %145 = vmatpush.bf16.msra.mxu0 0
    %146 = vmatpush.bf16.msra.mxu0 %v133
    %147 = vmatpush.bf16.msra.mxu0 %v132
    %148 = vmatmul.bf16.gmra.mxu0 %v138
    %v149 = vpop.f32.mrf.mxu0
    %v150 = vadd.f32 %v122, %v149
    %v151 = vpop.f32.mrf.mxu0
    %v152 = vadd.f32 %v122, %v151
    %153 = vdwg.mxu0
    %v154 = vmax.f32 %v150, 0.0
    %v155 = vmax.f32 %v152, 0.0
    %v156 = vld [vmem:[%s5] sm:$0x1]
    %s157 = sld [smem:[#allocation2]]
    %v158 = vstv %s157
    %v160 = vsel %vm136, %v156, 0
    %v163 = vsel %vm136, %v154, 0
    %v166 = vsel %vm136, %v155, 0
    %168 = vmatpush.xpose.msra.mxu0 0.0
    %169 = vmatpush.xpose.msra.mxu0 0.0
    %170 = vmatpush.xpose.msra.mxu0 0.0
    %171 = vmatpush.xpose.msra.mxu0 0.0
    %172 = vmatpush.xpose.msra.mxu0 0.0
    %173 = vmatpush.xpose.msra.mxu0 0.0
    %174 = vmatpush.xpose.msra.mxu0 0.0
    %175 = vmatpush.xpose.msra.mxu0 0.0
    %176 = vmatpush.xpose.msra.mxu0 0.0
    %177 = vmatpush.xpose.msra.mxu0 0.0
    %178 = vmatpush.xpose.msra.mxu0 0.0
    %179 = vmatpush.xpose.msra.mxu0 0.0
    %180 = vmatpush.xpose.msra.mxu0 0.0
    %181 = vmatpush.xpose.msra.mxu0 0.0
    %182 = vmatpush.xpose.msra.mxu0 %v166
    %183 = vmatpush.xpose.msra.mxu0 %v163
    %184 = vmatmul.f32.gmra.mxu0 %v160
    %v185 = vpop.f32.mrf.mxu0
    %v186 = vadd.f32 %v158, %v185
    %187 = vdwg.mxu0
    %vm188 = vcmask 122880
    %189 = vst.msk [vmem:[#allocation9] sm:$0x1] %vm188, %v186
    // Predicated region
    $region42: #{tpu_custom_call.1} parent=1 // pred_check
      _
    $region43: #{tpu_custom_call.1} parent=1 // pred_check_branch
      %191 = sbr.rel (0) target = $region45
    $region44: #{tpu_custom_call.1} parent=1 // pred_region
      %193 = vsyncadd [#allocation5], 0
      %s195 = sshll.u32 [#allocation9], 4
      %s196 = int_to_ptr.vmem [resolvable:$true] %s195
      %s197 = sshll.u32 %s7, 4
      %s198 = int_to_ptr.hbm [resolvable:$true] %s197
      %200 = dma.vmem_to_hbm [thread:$0]  %s196, 16, %s198, [#allocation5]
    $region45: #{tpu_custom_call.1} parent=1 // pred_fallthru
      _
    // Predicated region
    $region46: #{tpu_custom_call.1} parent=1 // pred_check
      _
    $region47: #{tpu_custom_call.1} parent=1 // pred_check_branch
      %202 = sbr.rel (0) target = $region49
    $region48: #{tpu_custom_call.1} parent=1 // pred_region
      %204 = dma.done [#allocation5], 16
    $region49: #{tpu_custom_call.1} parent=1 // pred_fallthru
      _
    %205 = vsyncpa [#allocation4], 1
    %206 = vsyncpa [#allocation7], 1
    %207 = vsyncpa [#allocation5], 1

</llo_original>
